<compile_context>
chip_gen: v7x
topology: tpu7x:2x2x1
jax: 0.10.0
libtpu: 0.0.40
codegen_flags: <defaults>
</compile_context>

<pallas_src>
import jax
import jax.numpy as jnp
from jax.experimental import pallas as pl
from jax.experimental.pallas import tpu as pltpu


def dqn_kernel(x_ref, w1_ref, b1_ref, w2_ref, b2_ref, w3_ref, b3_ref, o_ref):
    cdt = w1_ref.dtype                       # compute dtype (bf16 fast path or f32)
    # Layer 1: Linear(state_dim, 128) + ReLU   (MXU, f32 accumulate)
    x = x_ref[...].astype(cdt)               # no-op if producer already hands bf16
    h1 = jnp.dot(x, w1_ref[...], preferred_element_type=jnp.float32).astype(cdt)
    h1 = jnp.maximum(h1 + b1_ref[...], 0.0)  # bias+ReLU stay in compute dtype
    # Layer 2: Linear(128, 64) + ReLU
    h2 = jnp.dot(h1, w2_ref[...], preferred_element_type=jnp.float32).astype(cdt)
    h2 = jnp.maximum(h2 + b2_ref[...], 0.0)
    # Layer 3: Linear(64, action_dim); final bias-add / output stay f32.
    o_ref[...] = (
        jnp.dot(h2, w3_ref[...], preferred_element_type=jnp.float32)
        + b3_ref[...]
    ).astype(o_ref.dtype)


def _pick_tile_b(B, max_tile=4096):
    """Batch tile: multiple of 8 (sublane), >=2 grid steps when B>8 (v7x megacore),
    capped at max_tile (VMEM-safe on every generation, incl. v7x's 64 MiB part)."""
    if B <= 8:
        return 8
    half = -(-B // 2)                 # cdiv(B, 2) -> at least 2 grid steps
    tb = ((half + 7) // 8) * 8        # round up to sublane multiple
    return max(8, min(max_tile, tb))


def dqn_forward(x, params, *, compute_dtype=jnp.bfloat16, max_tile_b=4096):
    w1, b1, w2, b2, w3, b3 = params
    B, state_dim = x.shape
    h1_dim, h2_dim, action_dim = w1.shape[1], w2.shape[1], w3.shape[1]

    # Weights + hidden biases in compute_dtype (bf16 MXU/VPU fast path on
    # v6e/v7x); final bias stays f32 to match the f32 output epilogue.
    w1c, w2c, w3c = (w.astype(compute_dtype) for w in (w1, w2, w3))
    b1c, b2c = (b.astype(compute_dtype) for b in (b1, b2))
    b3c = b3.astype(jnp.float32)

    tb = _pick_tile_b(B, max_tile_b)
    grid = (pl.cdiv(B, tb),)          # ragged final block handled by Pallas masking

    def resident(a):                  # full-array block, constant index_map
        nd = a.ndim
        return pl.BlockSpec(a.shape, lambda i: (0,) * nd)

    flops = 2 * B * (state_dim * h1_dim + h1_dim * h2_dim + h2_dim * action_dim)
    bytes_accessed = int(
        x.size * x.dtype.itemsize                 # streamed in
        + B * action_dim * 4                      # streamed out (f32)
        + sum(a.size * a.dtype.itemsize           # resident weights/biases
              for a in (w1c, b1c, w2c, b2c, w3c, b3c)))

    return pl.pallas_call(
        dqn_kernel,
        out_shape=jax.ShapeDtypeStruct((B, action_dim), jnp.float32),
        grid=grid,
        in_specs=[
            pl.BlockSpec((tb, state_dim), lambda i: (i, 0)),   # x: streamed
            resident(w1c), resident(b1c),
            resident(w2c), resident(b2c),
            resident(w3c), resident(b3c),
        ],
        out_specs=pl.BlockSpec((tb, action_dim), lambda i: (i, 0)),
        compiler_params=pltpu.CompilerParams(
            dimension_semantics=("parallel",),    # v7x megacore; no-op on v5e/v6e
        ),
        cost_estimate=pl.CostEstimate(
            flops=flops, transcendentals=0, bytes_accessed=bytes_accessed),
    )(x, w1c, b1c, w2c, b2c, w3c, b3c)


def init_dqn_params(key, state_dim, action_dim):
    """Deterministic init mimicking PyTorch Linear default (uniform +-1/sqrt(fan_in))."""
    dims = [(state_dim, 128), (128, 64), (64, action_dim)]
    params = []
    for i, (fan_in, fan_out) in enumerate(dims):
        kw, kb = jax.random.split(jax.random.fold_in(key, i))
        bound = 1.0 / jnp.sqrt(jnp.float32(fan_in))
        w = jax.random.uniform(kw, (fan_in, fan_out), jnp.float32, -bound, bound)
        b = jax.random.uniform(kb, (1, fan_out), jnp.float32, -bound, bound)
        params += [w, b]
    return tuple(params)


def dqn_reference(x, params):
    # Pure-f32 reference matching the PyTorch module semantics.
    w1, b1, w2, b2, w3, b3 = params
    h1 = jnp.maximum(x @ w1 + b1, 0.0)
    h2 = jnp.maximum(h1 @ w2 + b2, 0.0)
    return h2 @ w3 + b3


if __name__ == "__main__":
    key = jax.random.PRNGKey(0)
    state_dim, action_dim, batch = 16, 4, 8

    kx, kp = jax.random.split(key)
    x = jax.random.normal(kx, (batch, state_dim), jnp.float32)
    params = init_dqn_params(kp, state_dim, action_dim)
    ref = dqn_reference(x, params)

    # f32 path: parity with the f32 PyTorch DQN (for argmax-tie-sensitive use).
    out_f32 = dqn_forward(x, params, compute_dtype=jnp.float32)
    jax.block_until_ready(out_f32)
    assert out_f32.shape == (batch, action_dim)
    assert jnp.allclose(out_f32, ref, atol=1e-2, rtol=1e-2), (
        f"f32 path max abs err {jnp.max(jnp.abs(out_f32 - ref))}")

    # Default bf16 fast path (bf16 MXU operands, f32 accumulation).
    out = dqn_forward(x, params)
    jax.block_until_ready(out)
    assert out.shape == (batch, action_dim)
    assert jnp.allclose(out, ref, atol=2e-2, rtol=2e-2), (
        f"bf16 path max abs err {jnp.max(jnp.abs(out - ref))}")

    # Ragged / multi-step grid coverage (non-divisible batch -> cdiv grid,
    # >=2 grid steps -> exercises the v7x megacore split + masked final block).
    B2 = 37
    x2 = jax.random.normal(jax.random.fold_in(key, 7), (B2, state_dim), jnp.float32)
    out2 = dqn_forward(x2, params)
    jax.block_until_ready(out2)
    assert out2.shape == (B2, action_dim)
    assert jnp.allclose(out2, dqn_reference(x2, params), atol=2e-2, rtol=2e-2), (
        f"ragged path max abs err {jnp.max(jnp.abs(out2 - dqn_reference(x2, params)))}")

    print("KERNEL_OK")
</pallas_src>

<mosaic_0001>
module attributes {stable_mosaic.version = 11 : i64} {
  func.func @dqn_kernel(%arg0: i32, %arg1: memref<8x16xf32, #tpu.memory_space<vmem>>, %arg2: memref<16x128xf32, #tpu.memory_space<vmem>>, %arg3: memref<1x128xf32, #tpu.memory_space<vmem>>, %arg4: memref<128x64xf32, #tpu.memory_space<vmem>>, %arg5: memref<1x64xf32, #tpu.memory_space<vmem>>, %arg6: memref<64x4xf32, #tpu.memory_space<vmem>>, %arg7: memref<1x4xf32, #tpu.memory_space<vmem>>, %arg8: memref<8x4xf32, #tpu.memory_space<vmem>>) attributes {dimension_semantics = [#tpu.dimension_semantics<parallel>], iteration_bounds = array<i64: 1>, scalar_prefetch = 0 : i64, scratch_operands = 0 : i64, tpu.core_type = #tpu.core_type<tc>, window_params = [{transform_indices = @transform_0, window_bounds = array<i64: 8, 16>}, {pipeline_mode = #tpu.pipeline_mode<synchronous>, transform_indices = @transform_1, window_bounds = array<i64: 16, 128>}, {pipeline_mode = #tpu.pipeline_mode<synchronous>, transform_indices = @transform_2, window_bounds = array<i64: 1, 128>}, {pipeline_mode = #tpu.pipeline_mode<synchronous>, transform_indices = @transform_3, window_bounds = array<i64: 128, 64>}, {pipeline_mode = #tpu.pipeline_mode<synchronous>, transform_indices = @transform_4, window_bounds = array<i64: 1, 64>}, {pipeline_mode = #tpu.pipeline_mode<synchronous>, transform_indices = @transform_5, window_bounds = array<i64: 64, 4>}, {pipeline_mode = #tpu.pipeline_mode<synchronous>, transform_indices = @transform_6, window_bounds = array<i64: 1, 4>}, {transform_indices = @transform_7, window_bounds = array<i64: 8, 4>}]} {
    %c0 = arith.constant 0 : index
    %c0_0 = arith.constant 0 : index
    %0 = vector.load %arg1[%c0, %c0_0] : memref<8x16xf32, #tpu.memory_space<vmem>>, vector<8x16xf32>
    %c0_1 = arith.constant 0 : index
    %c0_2 = arith.constant 0 : index
    %1 = vector.load %arg2[%c0_1, %c0_2] : memref<16x128xf32, #tpu.memory_space<vmem>>, vector<16x128xf32>
    %cst = arith.constant dense<0.000000e+00> : vector<8x128xf32>
    %2 = tpu.matmul %0, %1, %cst {dimension_numbers = #tpu.dot_dimension_numbers<[1], [0], [0], [1], [0, 0, 1, 1], [], []>} : vector<8x16xf32>, vector<16x128xf32>, vector<8x128xf32> -> vector<8x128xf32>
    %c0_3 = arith.constant 0 : index
    %c0_4 = arith.constant 0 : index
    %3 = vector.load %arg3[%c0_3, %c0_4] : memref<1x128xf32, #tpu.memory_space<vmem>>, vector<1x128xf32>
    %4 = vector.broadcast %3 : vector<1x128xf32> to vector<8x128xf32>
    %5 = arith.addf %2, %4 : vector<8x128xf32>
    %cst_5 = arith.constant 0.000000e+00 : f32
    %6 = vector.broadcast %cst_5 : f32 to vector<8x128xf32>
    %7 = arith.maximumf %5, %6 : vector<8x128xf32>
    %c0_6 = arith.constant 0 : index
    %c0_7 = arith.constant 0 : index
    %8 = vector.load %arg4[%c0_6, %c0_7] : memref<128x64xf32, #tpu.memory_space<vmem>>, vector<128x64xf32>
    %cst_8 = arith.constant dense<0.000000e+00> : vector<8x64xf32>
    %9 = tpu.matmul %7, %8, %cst_8 {dimension_numbers = #tpu.dot_dimension_numbers<[1], [0], [0], [1], [0, 0, 1, 1], [], []>} : vector<8x128xf32>, vector<128x64xf32>, vector<8x64xf32> -> vector<8x64xf32>
    %c0_9 = arith.constant 0 : index
    %c0_10 = arith.constant 0 : index
    %10 = vector.load %arg5[%c0_9, %c0_10] : memref<1x64xf32, #tpu.memory_space<vmem>>, vector<1x64xf32>
    %11 = vector.broadcast %10 : vector<1x64xf32> to vector<8x64xf32>
    %12 = arith.addf %9, %11 : vector<8x64xf32>
    %cst_11 = arith.constant 0.000000e+00 : f32
    %13 = vector.broadcast %cst_11 : f32 to vector<8x64xf32>
    %14 = arith.maximumf %12, %13 : vector<8x64xf32>
    %c0_12 = arith.constant 0 : index
    %c0_13 = arith.constant 0 : index
    %15 = vector.load %arg6[%c0_12, %c0_13] : memref<64x4xf32, #tpu.memory_space<vmem>>, vector<64x4xf32>
    %cst_14 = arith.constant dense<0.000000e+00> : vector<8x4xf32>
    %16 = tpu.matmul %14, %15, %cst_14 {dimension_numbers = #tpu.dot_dimension_numbers<[1], [0], [0], [1], [0, 0, 1, 1], [], []>} : vector<8x64xf32>, vector<64x4xf32>, vector<8x4xf32> -> vector<8x4xf32>
    %c0_15 = arith.constant 0 : index
    %c0_16 = arith.constant 0 : index
    %17 = vector.load %arg7[%c0_15, %c0_16] : memref<1x4xf32, #tpu.memory_space<vmem>>, vector<1x4xf32>
    %18 = vector.broadcast %17 : vector<1x4xf32> to vector<8x4xf32>
    %19 = arith.addf %16, %18 : vector<8x4xf32>
    %c0_17 = arith.constant 0 : index
    %c0_18 = arith.constant 0 : index
    %20 = vector.load %arg8[%c0_17, %c0_18] : memref<8x4xf32, #tpu.memory_space<vmem>>, vector<8x4xf32>
    tpu.vector_store %arg8[%c0_17, %c0_18], %19 {strides = array<i32>} : memref<8x4xf32, #tpu.memory_space<vmem>>, vector<8x4xf32>,
    return
  }
  func.func @transform_0(%arg0: i32) -> (i32, i32) {
    %c0_i32 = arith.constant 0 : i32
    %c0_i32_0 = arith.constant 0 : i32
    return %arg0, %c0_i32 : i32, i32
  }
  func.func @transform_1(%arg0: i32) -> (i32, i32) {
    %c0_i32 = arith.constant 0 : i32
    %c0_i32_0 = arith.constant 0 : i32
    %c0_i32_1 = arith.constant 0 : i32
    return %c0_i32, %c0_i32_0 : i32, i32
  }
  func.func @transform_2(%arg0: i32) -> (i32, i32) {
    %c0_i32 = arith.constant 0 : i32
    %c0_i32_0 = arith.constant 0 : i32
    %c0_i32_1 = arith.constant 0 : i32
    return %c0_i32, %c0_i32_0 : i32, i32
  }
  func.func @transform_3(%arg0: i32) -> (i32, i32) {
    %c0_i32 = arith.constant 0 : i32
    %c0_i32_0 = arith.constant 0 : i32
    %c0_i32_1 = arith.constant 0 : i32
    return %c0_i32, %c0_i32_0 : i32, i32
  }
  func.func @transform_4(%arg0: i32) -> (i32, i32) {
    %c0_i32 = arith.constant 0 : i32
    %c0_i32_0 = arith.constant 0 : i32
    %c0_i32_1 = arith.constant 0 : i32
    return %c0_i32, %c0_i32_0 : i32, i32
  }
  func.func @transform_5(%arg0: i32) -> (i32, i32) {
    %c0_i32 = arith.constant 0 : i32
    %c0_i32_0 = arith.constant 0 : i32
    %c0_i32_1 = arith.constant 0 : i32
    return %c0_i32, %c0_i32_0 : i32, i32
  }
  func.func @transform_6(%arg0: i32) -> (i32, i32) {
    %c0_i32 = arith.constant 0 : i32
    %c0_i32_0 = arith.constant 0 : i32
    %c0_i32_1 = arith.constant 0 : i32
    return %c0_i32, %c0_i32_0 : i32, i32
  }
  func.func @transform_7(%arg0: i32) -> (i32, i32) {
    %c0_i32 = arith.constant 0 : i32
    %c0_i32_0 = arith.constant 0 : i32
    return %arg0, %c0_i32 : i32, i32
  }
}

</mosaic_0001>

<llo_original>
// kernel: tpu_custom_call.1
$region0: #{tpu_custom_call.1}
  #allocation0 [shape = 'u32[]', space=smem, size = 0x4, offset = 0x4, fixed_abs, tag = 'smem constant byte address 0x4 - core index']
  #allocation1 [shape = 'u32[144,128]{1,0:T(1,128)}', space=vmem, size = 0x12000, scoped, tag = 'internal scratch']
  %s0 = inlined_call_operand.vmem [shape: f32[8,16], index: 0, kind: input, shape index: {}]
  %s1 = inlined_call_operand.vmem [shape: f32[16,128], index: 1, kind: input, shape index: {}]
  %s2 = inlined_call_operand.vmem [shape: f32[1,128], index: 2, kind: input, shape index: {}]
  %s3 = inlined_call_operand.vmem [shape: f32[128,64], index: 3, kind: input, shape index: {}]
  %s4 = inlined_call_operand.vmem [shape: f32[1,64], index: 4, kind: input, shape index: {}]
  %s5 = inlined_call_operand.vmem [shape: f32[64,4], index: 5, kind: input, shape index: {}]
  %s6 = inlined_call_operand.vmem [shape: f32[1,4], index: 6, kind: input, shape index: {}]
  %s7 = inlined_call_operand.vmem [shape: f32[8,4], index: 7, kind: output, shape index: {}]
  %s8 = sld [smem:[#allocation0]]
  $region38: #{tpu_custom_call.1} parent=0
    _
  %s10 = ssub.s32 1, %s8
  %s11 = scalar_select 0, %s10, %s8
  // Predicated region
  $region2: #{tpu_custom_call.1} parent=0 // pred_check
    _
  $region3: #{tpu_custom_call.1} parent=0 // pred_check_branch
    %13 = sbr.rel (0) target = $region5
  $region4: #{tpu_custom_call.1} parent=0 // pred_region
    _
  $region5: #{tpu_custom_call.1} parent=0 // pred_fallthru
    _
  // Predicated region
  $region6: #{tpu_custom_call.1} parent=0 // pred_check
    _
  $region7: #{tpu_custom_call.1} parent=0 // pred_check_branch
    %15 = sbr.rel (0) target = $region9
  $region8: #{tpu_custom_call.1} parent=0 // pred_region
    _
  $region9: #{tpu_custom_call.1} parent=0 // pred_fallthru
    _
  // Predicated region
  $region10: #{tpu_custom_call.1} parent=0 // pred_check
    _
  $region11: #{tpu_custom_call.1} parent=0 // pred_check_branch
    %17 = sbr.rel (0) target = $region13
  $region12: #{tpu_custom_call.1} parent=0 // pred_region
    _
  $region13: #{tpu_custom_call.1} parent=0 // pred_fallthru
    _
  // Predicated region
  $region14: #{tpu_custom_call.1} parent=0 // pred_check
    _
  $region15: #{tpu_custom_call.1} parent=0 // pred_check_branch
    %19 = sbr.rel (0) target = $region17
  $region16: #{tpu_custom_call.1} parent=0 // pred_region
    _
  $region17: #{tpu_custom_call.1} parent=0 // pred_fallthru
    _
  // Predicated region
  $region18: #{tpu_custom_call.1} parent=0 // pred_check
    _
  $region19: #{tpu_custom_call.1} parent=0 // pred_check_branch
    %21 = sbr.rel (0) target = $region21
  $region20: #{tpu_custom_call.1} parent=0 // pred_region
    _
  $region21: #{tpu_custom_call.1} parent=0 // pred_fallthru
    _
  // Predicated region
  $region22: #{tpu_custom_call.1} parent=0 // pred_check
    _
  $region23: #{tpu_custom_call.1} parent=0 // pred_check_branch
    %23 = sbr.rel (0) target = $region25
  $region24: #{tpu_custom_call.1} parent=0 // pred_region
    _
  $region25: #{tpu_custom_call.1} parent=0 // pred_fallthru
    _
  // Predicated region
  $region26: #{tpu_custom_call.1} parent=0 // pred_check
    _
  $region27: #{tpu_custom_call.1} parent=0 // pred_check_branch
    %25 = sbr.rel (0) target = $region29
  $region28: #{tpu_custom_call.1} parent=0 // pred_region
    _
  $region29: #{tpu_custom_call.1} parent=0 // pred_fallthru
    _
  %v26 = vld [vmem:[%s0] sm:$0xff]
  %v27 = vld [vmem:[%s1] sm:$0xff]
  %v28 = vld [vmem:[%s1 + $0x8] sm:$0xff]
  %v29 = vld [vmem:[%s2] sm:$0x1]
  %v31 = vlaneseq
  %v32 = vshrl.u32 %v31, 7
  %v33 = vsub.s32 0, %v32
  %v34 = vrot.slane %v29, %v33
  %vm36 = vcmask 130048
  %v38 = vsel %vm36, %v26, 0
  %40 = vmatprep.subr.mxu0 0.0
  %41 = vmatpush1.msra.mxu0 %v27
  %42 = vmatprep.subr.mxu0 0.0
  %43 = vmatpush1.msra.mxu0 %v28
  %44 = vmatprep.subr.mxu0 0.0
  %45 = vmatpush1.msra.mxu0 0.0
  %46 = vmatprep.subr.mxu0 0.0
  %47 = vmatpush1.msra.mxu0 0.0
  %48 = vmatprep.subr.mxu0 0.0
  %49 = vmatpush1.msra.mxu0 0.0
  %50 = vmatprep.subr.mxu0 0.0
  %51 = vmatpush1.msra.mxu0 0.0
  %52 = vmatprep.subr.mxu0 0.0
  %53 = vmatpush1.msra.mxu0 0.0
  %54 = vmatprep.subr.mxu0 0.0
  %55 = vmatpush1.msra.mxu0 0.0
  %56 = vmatprep.subr.mxu0 0.0
  %57 = vmatpush1.msra.mxu0 0.0
  %58 = vmatprep.subr.mxu0 0.0
  %59 = vmatpush1.msra.mxu0 0.0
  %60 = vmatprep.subr.mxu0 0.0
  %61 = vmatpush1.msra.mxu0 0.0
  %62 = vmatprep.subr.mxu0 0.0
  %63 = vmatpush1.msra.mxu0 0.0
  %64 = vmatprep.subr.mxu0 0.0
  %65 = vmatpush1.msra.mxu0 0.0
  %66 = vmatprep.subr.mxu0 0.0
  %67 = vmatpush1.msra.mxu0 0.0
  %68 = vmatprep.subr.mxu0 0.0
  %69 = vmatpush1.msra.mxu0 0.0
  %70 = vmatprep.subr.mxu0 0.0
  %71 = vmatpush1.msra.mxu0 0.0
  %72 = vmatprep.subr.mxu0 0.0
  %73 = vmatpush1.msra.mxu0 0.0
  %74 = vmatprep.subr.mxu0 0.0
  %75 = vmatpush1.msra.mxu0 0.0
  %76 = vmatprep.subr.mxu0 0.0
  %77 = vmatpush1.msra.mxu0 0.0
  %78 = vmatprep.subr.mxu0 0.0
  %79 = vmatpush1.msra.mxu0 0.0
  %80 = vmatprep.subr.mxu0 0.0
  %81 = vmatpush1.msra.mxu0 0.0
  %82 = vmatprep.subr.mxu0 0.0
  %83 = vmatpush1.msra.mxu0 0.0
  %84 = vmatprep.subr.mxu0 0.0
  %85 = vmatpush1.msra.mxu0 0.0
  %86 = vmatprep.subr.mxu0 0.0
  %87 = vmatpush1.msra.mxu0 0.0
  %88 = vmatprep.subr.mxu0 0.0
  %89 = vmatpush1.msra.mxu0 0.0
  %90 = vmatprep.subr.mxu0 0.0
  %91 = vmatpush1.msra.mxu0 0.0
  %92 = vmatprep.subr.mxu0 0.0
  %93 = vmatpush1.msra.mxu0 0.0
  %94 = vmatprep.subr.mxu0 0.0
  %95 = vmatpush1.msra.mxu0 0.0
  %96 = vmatprep.subr.mxu0 0.0
  %97 = vmatpush1.msra.mxu0 0.0
  %98 = vmatprep.subr.mxu0 0.0
  %99 = vmatpush1.msra.mxu0 0.0
  %100 = vmatprep.subr.mxu0 0.0
  %101 = vmatpush1.msra.mxu0 0.0
  %102 = vmatprep.subr.mxu0 0.0
  %103 = vmatpush1.msra.mxu0 0.0
  %104 = vmatprep.mubr.f32.mxu0 0.0
  %105 = vmatmul.mubr.f32.gmra.mrb[0].mxu0 %v38
  %v106 = vpop.f32.mrb[0].mxu0
  %v107 = vadd.f32 %v34, %v106
  %v108 = vpop.f32.mrb[0].mxu0
  %109 = vdwg.mxu0
  %v110 = vmax.f32 %v107, 0.0
  %v111 = vld [vmem:[%s3] sm:$0xff]
  %v112 = vld [vmem:[%s3 + $0x8] sm:$0xff]
  %v113 = vld [vmem:[%s3 + $0x10] sm:$0xff]
  %v114 = vld [vmem:[%s3 + $0x18] sm:$0xff]
  %v115 = vld [vmem:[%s3 + $0x20] sm:$0xff]
  %v116 = vld [vmem:[%s3 + $0x28] sm:$0xff]
  %v117 = vld [vmem:[%s3 + $0x30] sm:$0xff]
  %v118 = vld [vmem:[%s3 + $0x38] sm:$0xff]
  %v119 = vld [vmem:[%s3 + $0x40] sm:$0xff]
  %v120 = vld [vmem:[%s3 + $0x48] sm:$0xff]
  %v121 = vld [vmem:[%s3 + $0x50] sm:$0xff]
  %v122 = vld [vmem:[%s3 + $0x58] sm:$0xff]
  %v123 = vld [vmem:[%s3 + $0x60] sm:$0xff]
  %v124 = vld [vmem:[%s3 + $0x68] sm:$0xff]
  %v125 = vld [vmem:[%s3 + $0x70] sm:$0xff]
  %v126 = vld [vmem:[%s3 + $0x78] sm:$0xff]
  %v127 = vld [vmem:[%s4] sm:$0x1]
  %v129 = vlaneseq
  %v130 = vshrl.u32 %v129, 7
  %v131 = vsub.s32 0, %v130
  %v132 = vrot.slane %v127, %v131
  %134 = vmatprep.subr.mxu0 0.0
  %135 = vmatpush1.msra.mxu0 %v111
  %136 = vmatprep.subr.mxu0 0.0
  %137 = vmatpush1.msra.mxu0 %v112
  %138 = vmatprep.subr.mxu0 0.0
  %139 = vmatpush1.msra.mxu0 %v113
  %140 = vmatprep.subr.mxu0 0.0
  %141 = vmatpush1.msra.mxu0 %v114
  %142 = vmatprep.subr.mxu0 0.0
  %143 = vmatpush1.msra.mxu0 %v115
  %144 = vmatprep.subr.mxu0 0.0
  %145 = vmatpush1.msra.mxu0 %v116
  %146 = vmatprep.subr.mxu0 0.0
  %147 = vmatpush1.msra.mxu0 %v117
  %148 = vmatprep.subr.mxu0 0.0
  %149 = vmatpush1.msra.mxu0 %v118
  %150 = vmatprep.subr.mxu0 0.0
  %151 = vmatpush1.msra.mxu0 %v119
  %152 = vmatprep.subr.mxu0 0.0
  %153 = vmatpush1.msra.mxu0 %v120
  %154 = vmatprep.subr.mxu0 0.0
  %155 = vmatpush1.msra.mxu0 %v121
  %156 = vmatprep.subr.mxu0 0.0
  %157 = vmatpush1.msra.mxu0 %v122
  %158 = vmatprep.subr.mxu0 0.0
  %159 = vmatpush1.msra.mxu0 %v123
  %160 = vmatprep.subr.mxu0 0.0
  %161 = vmatpush1.msra.mxu0 %v124
  %162 = vmatprep.subr.mxu0 0.0
  %163 = vmatpush1.msra.mxu0 %v125
  %164 = vmatprep.subr.mxu0 0.0
  %165 = vmatpush1.msra.mxu0 %v126
  %166 = vmatprep.subr.mxu0 0.0
  %167 = vmatpush1.msra.mxu0 0.0
  %168 = vmatprep.subr.mxu0 0.0
  %169 = vmatpush1.msra.mxu0 0.0
  %170 = vmatprep.subr.mxu0 0.0
  %171 = vmatpush1.msra.mxu0 0.0
  %172 = vmatprep.subr.mxu0 0.0
  %173 = vmatpush1.msra.mxu0 0.0
  %174 = vmatprep.subr.mxu0 0.0
  %175 = vmatpush1.msra.mxu0 0.0
  %176 = vmatprep.subr.mxu0 0.0
  %177 = vmatpush1.msra.mxu0 0.0
  %178 = vmatprep.subr.mxu0 0.0
  %179 = vmatpush1.msra.mxu0 0.0
  %180 = vmatprep.subr.mxu0 0.0
  %181 = vmatpush1.msra.mxu0 0.0
  %182 = vmatprep.subr.mxu0 0.0
  %183 = vmatpush1.msra.mxu0 0.0
  %184 = vmatprep.subr.mxu0 0.0
  %185 = vmatpush1.msra.mxu0 0.0
  %186 = vmatprep.subr.mxu0 0.0
  %187 = vmatpush1.msra.mxu0 0.0
  %188 = vmatprep.subr.mxu0 0.0
  %189 = vmatpush1.msra.mxu0 0.0
  %190 = vmatprep.subr.mxu0 0.0
  %191 = vmatpush1.msra.mxu0 0.0
  %192 = vmatprep.subr.mxu0 0.0
  %193 = vmatpush1.msra.mxu0 0.0
  %194 = vmatprep.subr.mxu0 0.0
  %195 = vmatpush1.msra.mxu0 0.0
  %196 = vmatprep.subr.mxu0 0.0
  %197 = vmatpush1.msra.mxu0 0.0
  %198 = vmatprep.mubr.f32.mxu0 0.0
  %199 = vmatmul.mubr.f32.gmra.mrb[0].mxu0 %v110
  %v200 = vpop.f32.mrb[0].mxu0
  %v201 = vadd.f32 %v132, %v200
  %v202 = vpop.f32.mrb[0].mxu0
  %203 = vdwg.mxu0
  %v204 = vmax.f32 %v201, 0.0
  %v205 = vld [vmem:[%s5] sm:$0xff]
  %v206 = vld [vmem:[%s5 + $0x8] sm:$0xff]
  %v207 = vld [vmem:[%s5 + $0x10] sm:$0xff]
  %v208 = vld [vmem:[%s5 + $0x18] sm:$0xff]
  %v209 = vld [vmem:[%s5 + $0x20] sm:$0xff]
  %v210 = vld [vmem:[%s5 + $0x28] sm:$0xff]
  %v211 = vld [vmem:[%s5 + $0x30] sm:$0xff]
  %v212 = vld [vmem:[%s5 + $0x38] sm:$0xff]
  %v213 = vld [vmem:[%s6] sm:$0x1]
  %v215 = vlaneseq
  %v216 = vshrl.u32 %v215, 7
  %v217 = vsub.s32 0, %v216
  %v218 = vrot.slane %v213, %v217
  %vm220 = vcmask 523264
  %v222 = vsel %vm220, %v204, 0
  %224 = vmatprep.subr.mxu0 0.0
  %225 = vmatpush1.msra.mxu0 %v205
  %226 = vmatprep.subr.mxu0 0.0
  %227 = vmatpush1.msra.mxu0 %v206
  %228 = vmatprep.subr.mxu0 0.0
  %229 = vmatpush1.msra.mxu0 %v207
  %230 = vmatprep.subr.mxu0 0.0
  %231 = vmatpush1.msra.mxu0 %v208
  %232 = vmatprep.subr.mxu0 0.0
  %233 = vmatpush1.msra.mxu0 %v209
  %234 = vmatprep.subr.mxu0 0.0
  %235 = vmatpush1.msra.mxu0 %v210
  %236 = vmatprep.subr.mxu0 0.0
  %237 = vmatpush1.msra.mxu0 %v211
  %238 = vmatprep.subr.mxu0 0.0
  %239 = vmatpush1.msra.mxu0 %v212
  %240 = vmatprep.subr.mxu0 0.0
  %241 = vmatpush1.msra.mxu0 0.0
  %242 = vmatprep.subr.mxu0 0.0
  %243 = vmatpush1.msra.mxu0 0.0
  %244 = vmatprep.subr.mxu0 0.0
  %245 = vmatpush1.msra.mxu0 0.0
  %246 = vmatprep.subr.mxu0 0.0
  %247 = vmatpush1.msra.mxu0 0.0
  %248 = vmatprep.subr.mxu0 0.0
  %249 = vmatpush1.msra.mxu0 0.0
  %250 = vmatprep.subr.mxu0 0.0
  %251 = vmatpush1.msra.mxu0 0.0
  %252 = vmatprep.subr.mxu0 0.0
  %253 = vmatpush1.msra.mxu0 0.0
  %254 = vmatprep.subr.mxu0 0.0
  %255 = vmatpush1.msra.mxu0 0.0
  %256 = vmatprep.subr.mxu0 0.0
  %257 = vmatpush1.msra.mxu0 0.0
  %258 = vmatprep.subr.mxu0 0.0
  %259 = vmatpush1.msra.mxu0 0.0
  %260 = vmatprep.subr.mxu0 0.0
  %261 = vmatpush1.msra.mxu0 0.0
  %262 = vmatprep.subr.mxu0 0.0
  %263 = vmatpush1.msra.mxu0 0.0
  %264 = vmatprep.subr.mxu0 0.0
  %265 = vmatpush1.msra.mxu0 0.0
  %266 = vmatprep.subr.mxu0 0.0
  %267 = vmatpush1.msra.mxu0 0.0
  %268 = vmatprep.subr.mxu0 0.0
  %269 = vmatpush1.msra.mxu0 0.0
  %270 = vmatprep.subr.mxu0 0.0
  %271 = vmatpush1.msra.mxu0 0.0
  %272 = vmatprep.subr.mxu0 0.0
  %273 = vmatpush1.msra.mxu0 0.0
  %274 = vmatprep.subr.mxu0 0.0
  %275 = vmatpush1.msra.mxu0 0.0
  %276 = vmatprep.subr.mxu0 0.0
  %277 = vmatpush1.msra.mxu0 0.0
  %278 = vmatprep.subr.mxu0 0.0
  %279 = vmatpush1.msra.mxu0 0.0
  %280 = vmatprep.subr.mxu0 0.0
  %281 = vmatpush1.msra.mxu0 0.0
  %282 = vmatprep.subr.mxu0 0.0
  %283 = vmatpush1.msra.mxu0 0.0
  %284 = vmatprep.subr.mxu0 0.0
  %285 = vmatpush1.msra.mxu0 0.0
  %286 = vmatprep.subr.mxu0 0.0
  %287 = vmatpush1.msra.mxu0 0.0
  %288 = vmatprep.mubr.f32.mxu0 0.0
  %289 = vmatmul.mubr.f32.gmra.mrb[0].mxu0 %v222
  %v290 = vpop.f32.mrb[0].mxu0
  %v291 = vadd.f32 %v218, %v290
  %v292 = vpop.f32.mrb[0].mxu0
  %293 = vdwg.mxu0
  %vm294 = vcmask 31744
  %295 = vst.msk [vmem:[%s7] sm:$0xff] %vm294, %v291
  // Predicated region
  $region30: #{tpu_custom_call.1} parent=0 // pred_check
    _
  $region31: #{tpu_custom_call.1} parent=0 // pred_check_branch
    %297 = sbr.rel (0) target = $region33
  $region32: #{tpu_custom_call.1} parent=0 // pred_region
    _
  $region33: #{tpu_custom_call.1} parent=0 // pred_fallthru
    _
  // Predicated region
  $region34: #{tpu_custom_call.1} parent=0 // pred_check
    _
  $region35: #{tpu_custom_call.1} parent=0 // pred_check_branch
    %299 = sbr.rel (0) target = $region37
  $region36: #{tpu_custom_call.1} parent=0 // pred_region
    _
  $region37: #{tpu_custom_call.1} parent=0 // pred_fallthru
    _

</llo_original>
